<compile_context>
chip_gen: v7x
topology: tpu7x:2x2x1
jax: 0.10.0
libtpu: 0.0.40
codegen_flags: <defaults>
</compile_context>

<pallas_src>
import functools

import jax
import jax.numpy as jnp
from jax.experimental import pallas as pl
from jax.experimental.pallas import tpu as pltpu


def _tge_kernel(x_ref, p_ref, q_ref, emb_ref, y_ref, sse_ref, *, m_valid):
    """Full forward for one row tile.

    x_ref   : [tm, K]  input rows (rows >= m_valid are undefined in the edge tile)
    p_ref   : [K, N]   concatenated projection P   (VMEM-resident, constant)
    q_ref   : [K, K]   Q = P @ P.T                 (VMEM-resident, constant)
    emb_ref : [tm, N]  encoded output tile
    y_ref   : [tm, K]  decoded output tile
    sse_ref : [1, K]   per-tile partial sum of squared error (valid rows only)
    """
    x = x_ref[...]

    # encode / decode: two independent MXU matmuls over the same x operand,
    # both contracting over K; accumulate in f32.
    emb = jnp.dot(x, p_ref[...], preferred_element_type=jnp.float32)   # [tm, N]
    y = jnp.dot(x, q_ref[...], preferred_element_type=jnp.float32)     # [tm, K]

    emb_ref[...] = emb.astype(emb_ref.dtype)
    y_ref[...] = y.astype(y_ref.dtype)

    # Squared-error partial: mask rows past the end of the array (edge-block
    # reads are undefined and must not contribute to the loss), then reduce
    # over rows (sublane direction, VPU/XLU only).
    tm = x.shape[0]
    r = pl.program_id(0) * tm + jax.lax.broadcasted_iota(jnp.int32, (tm, 1), 0)
    diff = jnp.where(r < m_valid, x.astype(jnp.float32) - y, 0.0)
    sse_ref[...] = jnp.sum(diff * diff, axis=0, keepdims=True)          # [1, K]


def _tge_loss_kernel(x_ref, q_ref, sse_ref, *, seq_len, ig):
    """Loss-only path: one (batch, seq-tile) step straight off the raw x.

    x_ref   : [ts, K]  seq rows [i*ts, i*ts+ts) of one batch (no wrapper copy)
    q_ref   : [K, K]   Q = P @ P.T (VMEM-resident, constant)
    sse_ref : [1, K]   per-tile partial sum of squared error
    """
    x = x_ref[...]
    y = jnp.dot(x, q_ref[...], preferred_element_type=jnp.float32)
    ts = x.shape[0]
    s = pl.program_id(1) * ts + jax.lax.broadcasted_iota(jnp.int32, (ts, 1), 0)
    valid = (s >= ig) & (s < seq_len)        # skip ignored rows and edge junk
    diff = jnp.where(valid, x.astype(jnp.float32) - y, 0.0)
    sse_ref[...] = jnp.sum(diff * diff, axis=0, keepdims=True)


def _row_tiles(m, tm):
    """Balanced row tiling: multiple-of-8 tiles (or one full-extent tile).

    Keeps an even number (>= 2) of tiles when there is enough work so the
    'parallel' grid axis can be split across both v7x TensorCores.
    """
    tm = max(8, (tm // 8) * 8)
    num_tiles = pl.cdiv(m, tm)
    if num_tiles == 1 and m >= 2048:
        num_tiles = 2
    elif num_tiles > 1 and num_tiles % 2 == 1:
        num_tiles += 1
    tm_eff = pl.cdiv(pl.cdiv(m, num_tiles), 8) * 8
    if tm_eff > m:
        tm_eff = m                            # single full-extent (legal) tile
    num_tiles = pl.cdiv(m, tm_eff)
    return num_tiles, tm_eff


@functools.partial(
    jax.jit,
    static_argnames=("ignore_first_group", "return_loss", "loss_only", "tm"))
def token_group_encoder_forward(x, projections, *, ignore_first_group=True,
                                return_loss=False, loss_only=False, tm=4096):
    """JAX wrapper reproducing TokenGroupEncoderSlow.forward.

    x           : [B, S, model_dim * token_group_size]
    projections : token_group_size arrays, each
                  [model_dim * token_group_size, model_dim // token_group_size]
    tm          : row-tile size; default 4096 fits the 16 MiB scoped-VMEM
                  default on all generations.  Larger tiles (v6e/v7x) trigger an
                  explicit vmem_limit_bytes below.
    loss_only   : skip emb/y materialization entirely (loss-only training step).
    """
    # Build the fused projection once (outside the kernel):
    #   concat_i(x' @ proj_i)      == x' @ concat_i(proj_i) = x' @ P
    #   sum_i emb_i @ proj_i.T     == emb @ P.T == x' @ (P @ P.T) = x' @ Q
    p32 = jnp.concatenate([jnp.asarray(pr, jnp.float32) for pr in projections],
                          axis=1)                     # [K, D]
    q32 = p32 @ p32.T                                 # [K, K]
    p = p32.astype(x.dtype)       # MXU never sees f32 operands on bf16 paths
    q = q32.astype(x.dtype)
    K, N = p.shape

    ig = 1 if ignore_first_group else 0
    assert x.ndim == 3 and x.shape[-1] == K
    B, S, _ = x.shape
    M = B * (S - ig)
    itemsize = jnp.dtype(x.dtype).itemsize

    if loss_only:
        # Read the raw [B, S, K] x directly (free view, no wrapper copy); mask
        # the ignored leading rows per batch inside the kernel.
        ts = S if S <= tm else max(8, (tm // 8) * 8)
        nt = pl.cdiv(S, ts)
        cost = pl.CostEstimate(
            flops=2 * B * S * K * K,
            transcendentals=0,
            bytes_accessed=itemsize * B * S * K + 4 * (K * K + B * nt * K))
        sse = pl.pallas_call(
            functools.partial(_tge_loss_kernel, seq_len=S, ig=ig),
            out_shape=jax.ShapeDtypeStruct((B, nt, 1, K), jnp.float32),
            grid_spec=pltpu.PrefetchScalarGridSpec(
                num_scalar_prefetch=0,
                grid=(B, nt),
                in_specs=[
                    pl.BlockSpec((None, ts, K), lambda b, i: (b, i, 0)),  # raw x
                    pl.BlockSpec((K, K), lambda b, i: (0, 0)),            # Q
                ],
                out_specs=pl.BlockSpec((None, None, 1, K),
                                       lambda b, i: (b, i, 0, 0)),
            ),
            compiler_params=pltpu.CompilerParams(
                dimension_semantics=("parallel", "parallel")),
            cost_estimate=cost,
        )(x, q)
        return {"loss": jnp.sum(sse) / (jnp.float32(M) * jnp.float32(K))}

    # TODO(synk): this is the one remaining HBM copy of x (see header note).
    x2 = x[:, ig:].reshape(M, K)

    num_tiles, tm_eff = _row_tiles(M, tm)

    # Approximate double-buffered VMEM footprint (lane dims padded to 128);
    # only raise the scoped-VMEM limit when the default would not suffice.
    lane = lambda d: pl.cdiv(d, 128) * 128
    vmem_est = 2 * itemsize * (tm_eff * lane(K)          # x tile
                               + tm_eff * lane(N)        # emb tile
                               + tm_eff * lane(K)        # y tile
                               + K * lane(N) + K * lane(K))  # P, Q
    vmem_limit = vmem_est + (4 << 20) if vmem_est > (14 << 20) else None

    cost = pl.CostEstimate(
        flops=2 * M * K * (N + K),
        transcendentals=0,
        bytes_accessed=(itemsize * M * (2 * K + N)
                        + 4 * (K * N + K * K + num_tiles * K)))

    emb2, y2, sse = pl.pallas_call(
        functools.partial(_tge_kernel, m_valid=M),
        out_shape=(
            jax.ShapeDtypeStruct((M, N), x.dtype),
            jax.ShapeDtypeStruct((M, K), x.dtype),
            jax.ShapeDtypeStruct((num_tiles, 1, K), jnp.float32),
        ),
        grid_spec=pltpu.PrefetchScalarGridSpec(
            num_scalar_prefetch=0,
            grid=(num_tiles,),
            in_specs=[
                pl.BlockSpec((tm_eff, K), lambda i: (i, 0)),     # x row tile
                pl.BlockSpec((K, N), lambda i: (0, 0)),          # P (resident)
                pl.BlockSpec((K, K), lambda i: (0, 0)),          # Q (resident)
            ],
            out_specs=[
                pl.BlockSpec((tm_eff, N), lambda i: (i, 0)),     # emb tile
                pl.BlockSpec((tm_eff, K), lambda i: (i, 0)),     # y tile
                pl.BlockSpec((None, 1, K), lambda i: (i, 0, 0)), # SSE partial
            ],
        ),
        compiler_params=pltpu.CompilerParams(
            dimension_semantics=("parallel",),
            vmem_limit_bytes=vmem_limit),
        cost_estimate=cost,
    )(x2, p, q)

    out = {
        # Exact-shape reshapes: pure bitcasts, no extra copies.
        "emb": emb2.reshape(B, S - ig, N),
        "y": y2.reshape(B, S - ig, K),
    }
    if return_loss:
        out["loss"] = jnp.sum(sse) / (jnp.float32(M) * jnp.float32(K))
    return out


if __name__ == "__main__":
    # Module config: model_dim=32, token_group_size=4 -> hidden_dim=8, K=128
    model_dim = 32
    token_group_size = 4
    hidden_dim = model_dim // token_group_size
    K = model_dim * token_group_size

    key = jax.random.PRNGKey(0)
    k_x, *k_ps = jax.random.split(key, token_group_size + 1)

    # nn.Parameter(torch.randn(K, model_dim // token_group_size) * 0.02), x G
    projections = tuple(
        jax.random.normal(kp, (K, hidden_dim), dtype=jnp.float32) * 0.02
        for kp in k_ps)

    # x: [batch=2, seq=8, model_dim*token_group_size=128]
    x = jax.random.normal(k_x, (2, 8, K), dtype=jnp.float32)

    out = token_group_encoder_forward(
        x, projections, ignore_first_group=True, return_loss=True)
    jax.block_until_ready(out)

    out_loss_only = token_group_encoder_forward(
        x, projections, ignore_first_group=True, return_loss=True,
        loss_only=True)
    jax.block_until_ready(out_loss_only)

    # plain-JAX reference (same math as the PyTorch module)
    p_full = jnp.concatenate(projections, axis=1)     # [K, model_dim]
    x_sl = x[:, 1:]
    emb_ref = x_sl @ p_full
    y_ref = emb_ref @ p_full.T
    loss_ref = jnp.mean((x_sl - y_ref) ** 2)

    assert out["emb"].shape == (2, 7, model_dim)
    assert out["y"].shape == (2, 7, K)
    assert jnp.allclose(out["emb"], emb_ref, atol=1e-5, rtol=1e-4)
    assert jnp.allclose(out["y"], y_ref, atol=1e-5, rtol=1e-4)
    assert jnp.allclose(out["loss"], loss_ref, atol=1e-5, rtol=1e-4)
    assert jnp.allclose(out_loss_only["loss"], loss_ref, atol=1e-5, rtol=1e-4)

    print("KERNEL_OK")
</pallas_src>

<mosaic_0001>
module attributes {stable_mosaic.version = 11 : i64} {
  func.func @_tge_kernel(%arg0: i32, %arg1: memref<14x128xf32, #tpu.memory_space<vmem>>, %arg2: memref<128x32xf32, #tpu.memory_space<vmem>>, %arg3: memref<128x128xf32, #tpu.memory_space<vmem>>, %arg4: memref<14x32xf32, #tpu.memory_space<vmem>>, %arg5: memref<14x128xf32, #tpu.memory_space<vmem>>, %arg6: memref<1x1x128xf32, #tpu.memory_space<vmem>>) attributes {dimension_semantics = [#tpu.dimension_semantics<parallel>], iteration_bounds = array<i64: 1>, scalar_prefetch = 0 : i64, scratch_operands = 0 : i64, tpu.core_type = #tpu.core_type<tc>, window_params = [{transform_indices = @transform_0, window_bounds = array<i64: 14, 128>}, {pipeline_mode = #tpu.pipeline_mode<synchronous>, transform_indices = @transform_1, window_bounds = array<i64: 128, 32>}, {pipeline_mode = #tpu.pipeline_mode<synchronous>, transform_indices = @transform_2, window_bounds = array<i64: 128, 128>}, {transform_indices = @transform_3, window_bounds = array<i64: 14, 32>}, {transform_indices = @transform_4, window_bounds = array<i64: 14, 128>}, {transform_indices = @transform_5, window_bounds = array<i64: 1, 1, 128>}]} {
    %c0 = arith.constant 0 : index
    %c0_0 = arith.constant 0 : index
    %0 = vector.load %arg1[%c0, %c0_0] : memref<14x128xf32, #tpu.memory_space<vmem>>, vector<14x128xf32>
    %c0_1 = arith.constant 0 : index
    %c0_2 = arith.constant 0 : index
    %1 = vector.load %arg2[%c0_1, %c0_2] : memref<128x32xf32, #tpu.memory_space<vmem>>, vector<128x32xf32>
    %cst = arith.constant dense<0.000000e+00> : vector<14x32xf32>
    %2 = tpu.matmul %0, %1, %cst {dimension_numbers = #tpu.dot_dimension_numbers<[1], [0], [0], [1], [0, 0, 1, 1], [], []>} : vector<14x128xf32>, vector<128x32xf32>, vector<14x32xf32> -> vector<14x32xf32>
    %c0_3 = arith.constant 0 : index
    %c0_4 = arith.constant 0 : index
    %3 = vector.load %arg3[%c0_3, %c0_4] : memref<128x128xf32, #tpu.memory_space<vmem>>, vector<128x128xf32>
    %cst_5 = arith.constant dense<0.000000e+00> : vector<14x128xf32>
    %4 = tpu.matmul %0, %3, %cst_5 {dimension_numbers = #tpu.dot_dimension_numbers<[1], [0], [0], [1], [0, 0, 1, 1], [], []>} : vector<14x128xf32>, vector<128x128xf32>, vector<14x128xf32> -> vector<14x128xf32>
    %c0_6 = arith.constant 0 : index
    %c0_7 = arith.constant 0 : index
    %5 = vector.load %arg4[%c0_6, %c0_7] : memref<14x32xf32, #tpu.memory_space<vmem>>, vector<14x32xf32>
    tpu.vector_store %arg4[%c0_6, %c0_7], %2 {strides = array<i32>} : memref<14x32xf32, #tpu.memory_space<vmem>>, vector<14x32xf32>,
    %c0_8 = arith.constant 0 : index
    %c0_9 = arith.constant 0 : index
    %6 = vector.load %arg5[%c0_8, %c0_9] : memref<14x128xf32, #tpu.memory_space<vmem>>, vector<14x128xf32>
    tpu.vector_store %arg5[%c0_8, %c0_9], %4 {strides = array<i32>} : memref<14x128xf32, #tpu.memory_space<vmem>>, vector<14x128xf32>,
    %c14_i32 = arith.constant 14 : i32
    %7 = arith.muli %arg0, %c14_i32 : i32
    %8 = tpu.iota {dimensions = array<i32: 0>} : vector<14x1xi32>
    %9 = vector.broadcast %7 : i32 to vector<14x1xi32>
    %10 = arith.addi %9, %8 : vector<14x1xi32>
    %c14_i32_10 = arith.constant 14 : i32
    %11 = vector.broadcast %c14_i32_10 : i32 to vector<14x1xi32>
    %12 = arith.cmpi slt, %10, %11 : vector<14x1xi32>
    %13 = arith.subf %0, %4 : vector<14x128xf32>
    %cst_11 = arith.constant 0.000000e+00 : f32
    %14 = vector.shape_cast %12 : vector<14x1xi1> to vector<14x1xi1>
    %15 = vector.broadcast %14 : vector<14x1xi1> to vector<14x128xi1>
    %16 = vector.broadcast %cst_11 : f32 to vector<14x128xf32>
    %17 = arith.select %15, %13, %16 : vector<14x128xi1>, vector<14x128xf32>
    %18 = arith.mulf %17, %17 : vector<14x128xf32>
    %cst_12 = arith.constant dense<0.000000e+00> : vector<128xf32>
    %19 = vector.multi_reduction <add>, %18, %cst_12 [0] : vector<14x128xf32> to vector<128xf32>
    %20 = vector.shape_cast %19 : vector<128xf32> to vector<1x128xf32>
    %c0_13 = arith.constant 0 : index
    %c0_14 = arith.constant 0 : index
    %c0_15 = arith.constant 0 : index
    %21 = vector.load %arg6[%c0_13, %c0_14, %c0_15] : memref<1x1x128xf32, #tpu.memory_space<vmem>>, vector<1x1x128xf32>
    %22 = vector.shape_cast %21 : vector<1x1x128xf32> to vector<1x128xf32>
    %23 = vector.shape_cast %20 : vector<1x128xf32> to vector<1x1x128xf32>
    tpu.vector_store %arg6[%c0_13, %c0_14, %c0_15], %23 {strides = array<i32>} : memref<1x1x128xf32, #tpu.memory_space<vmem>>, vector<1x1x128xf32>,
    return
  }
  func.func @transform_0(%arg0: i32) -> (i32, i32) {
    %c0_i32 = arith.constant 0 : i32
    %c0_i32_0 = arith.constant 0 : i32
    return %arg0, %c0_i32 : i32, i32
  }
  func.func @transform_1(%arg0: i32) -> (i32, i32) {
    %c0_i32 = arith.constant 0 : i32
    %c0_i32_0 = arith.constant 0 : i32
    %c0_i32_1 = arith.constant 0 : i32
    return %c0_i32, %c0_i32_0 : i32, i32
  }
  func.func @transform_2(%arg0: i32) -> (i32, i32) {
    %c0_i32 = arith.constant 0 : i32
    %c0_i32_0 = arith.constant 0 : i32
    %c0_i32_1 = arith.constant 0 : i32
    return %c0_i32, %c0_i32_0 : i32, i32
  }
  func.func @transform_3(%arg0: i32) -> (i32, i32) {
    %c0_i32 = arith.constant 0 : i32
    %c0_i32_0 = arith.constant 0 : i32
    return %arg0, %c0_i32 : i32, i32
  }
  func.func @transform_4(%arg0: i32) -> (i32, i32) {
    %c0_i32 = arith.constant 0 : i32
    %c0_i32_0 = arith.constant 0 : i32
    return %arg0, %c0_i32 : i32, i32
  }
  func.func @transform_5(%arg0: i32) -> (i32, i32, i32) {
    %c0_i32 = arith.constant 0 : i32
    %c0_i32_0 = arith.constant 0 : i32
    %c0_i32_1 = arith.constant 0 : i32
    return %arg0, %c0_i32, %c0_i32_0 : i32, i32, i32
  }
}

</mosaic_0001>

<llo_original>
// kernel: token_group_encoder_forward.1
$region0: #{token_group_encoder_forward.1}
  #allocation0 [shape = 'u32[]', space=smem, size = 0x4, offset = 0x4, fixed_abs, tag = 'smem constant byte address 0x4 - core index']
  #allocation1 [shape = 'u32[144,128]{1,0:T(1,128)}', space=vmem, size = 0x12000, scoped, tag = 'internal scratch']
  %s0 = inlined_call_operand.vmem [shape: f32[14,128], index: 0, kind: input, shape index: {}]
  %s1 = inlined_call_operand.vmem [shape: f32[128,32], index: 1, kind: input, shape index: {}]
  %s2 = inlined_call_operand.vmem [shape: f32[128,128], index: 2, kind: input, shape index: {}]
  %s3 = inlined_call_operand.vmem [shape: f32[14,32], index: 3, kind: output, shape index: {0}]
  %s4 = inlined_call_operand.vmem [shape: f32[14,128], index: 4, kind: output, shape index: {1}]
  %s5 = inlined_call_operand.vmem [shape: f32[1,1,128], index: 5, kind: output, shape index: {2}]
  %6 = xla_tuple %s3, %s4, %s5
  %s7 = sld [smem:[#allocation0]]
  $region38: #{token_group_encoder_forward.1} parent=0
    _
  %s9 = ssub.s32 1, %s7
  %s10 = scalar_select 0, %s9, %s7
  // Predicated region
  $region2: #{token_group_encoder_forward.1} parent=0 // pred_check
    _
  $region3: #{token_group_encoder_forward.1} parent=0 // pred_check_branch
    %12 = sbr.rel (0) target = $region5
  $region4: #{token_group_encoder_forward.1} parent=0 // pred_region
    _
  $region5: #{token_group_encoder_forward.1} parent=0 // pred_fallthru
    _
  // Predicated region
  $region6: #{token_group_encoder_forward.1} parent=0 // pred_check
    _
  $region7: #{token_group_encoder_forward.1} parent=0 // pred_check_branch
    %14 = sbr.rel (0) target = $region9
  $region8: #{token_group_encoder_forward.1} parent=0 // pred_region
    _
  $region9: #{token_group_encoder_forward.1} parent=0 // pred_fallthru
    _
  // Predicated region
  $region10: #{token_group_encoder_forward.1} parent=0 // pred_check
    _
  $region11: #{token_group_encoder_forward.1} parent=0 // pred_check_branch
    %16 = sbr.rel (0) target = $region13
  $region12: #{token_group_encoder_forward.1} parent=0 // pred_region
    _
  $region13: #{token_group_encoder_forward.1} parent=0 // pred_fallthru
    _
  %v17 = vld [vmem:[%s0] sm:$0xff]
  %v18 = vld [vmem:[%s0 + $0x8] sm:$0x3f]
  %v19 = vld [vmem:[%s1] sm:$0xff]
  %v20 = vld [vmem:[%s1 + $0x8] sm:$0xff]
  %v21 = vld [vmem:[%s1 + $0x10] sm:$0xff]
  %v22 = vld [vmem:[%s1 + $0x18] sm:$0xff]
  %v23 = vld [vmem:[%s1 + $0x20] sm:$0xff]
  %v24 = vld [vmem:[%s1 + $0x28] sm:$0xff]
  %v25 = vld [vmem:[%s1 + $0x30] sm:$0xff]
  %v26 = vld [vmem:[%s1 + $0x38] sm:$0xff]
  %v27 = vld [vmem:[%s1 + $0x40] sm:$0xff]
  %v28 = vld [vmem:[%s1 + $0x48] sm:$0xff]
  %v29 = vld [vmem:[%s1 + $0x50] sm:$0xff]
  %v30 = vld [vmem:[%s1 + $0x58] sm:$0xff]
  %v31 = vld [vmem:[%s1 + $0x60] sm:$0xff]
  %v32 = vld [vmem:[%s1 + $0x68] sm:$0xff]
  %v33 = vld [vmem:[%s1 + $0x70] sm:$0xff]
  %v34 = vld [vmem:[%s1 + $0x78] sm:$0xff]
  %35 = vmatprep.subr.mxu0 0.0
  %36 = vmatpush1.msra.mxu0 %v19
  %37 = vmatprep.subr.mxu0 0.0
  %38 = vmatpush1.msra.mxu0 %v20
  %39 = vmatprep.subr.mxu0 0.0
  %40 = vmatpush1.msra.mxu0 %v21
  %41 = vmatprep.subr.mxu0 0.0
  %42 = vmatpush1.msra.mxu0 %v22
  %43 = vmatprep.subr.mxu0 0.0
  %44 = vmatpush1.msra.mxu0 %v23
  %45 = vmatprep.subr.mxu0 0.0
  %46 = vmatpush1.msra.mxu0 %v24
  %47 = vmatprep.subr.mxu0 0.0
  %48 = vmatpush1.msra.mxu0 %v25
  %49 = vmatprep.subr.mxu0 0.0
  %50 = vmatpush1.msra.mxu0 %v26
  %51 = vmatprep.subr.mxu0 0.0
  %52 = vmatpush1.msra.mxu0 %v27
  %53 = vmatprep.subr.mxu0 0.0
  %54 = vmatpush1.msra.mxu0 %v28
  %55 = vmatprep.subr.mxu0 0.0
  %56 = vmatpush1.msra.mxu0 %v29
  %57 = vmatprep.subr.mxu0 0.0
  %58 = vmatpush1.msra.mxu0 %v30
  %59 = vmatprep.subr.mxu0 0.0
  %60 = vmatpush1.msra.mxu0 %v31
  %61 = vmatprep.subr.mxu0 0.0
  %62 = vmatpush1.msra.mxu0 %v32
  %63 = vmatprep.subr.mxu0 0.0
  %64 = vmatpush1.msra.mxu0 %v33
  %65 = vmatprep.subr.mxu0 0.0
  %66 = vmatpush1.msra.mxu0 %v34
  %67 = vmatprep.subr.mxu0 0.0
  %68 = vmatpush1.msra.mxu0 0.0
  %69 = vmatprep.subr.mxu0 0.0
  %70 = vmatpush1.msra.mxu0 0.0
  %71 = vmatprep.subr.mxu0 0.0
  %72 = vmatpush1.msra.mxu0 0.0
  %73 = vmatprep.subr.mxu0 0.0
  %74 = vmatpush1.msra.mxu0 0.0
  %75 = vmatprep.subr.mxu0 0.0
  %76 = vmatpush1.msra.mxu0 0.0
  %77 = vmatprep.subr.mxu0 0.0
  %78 = vmatpush1.msra.mxu0 0.0
  %79 = vmatprep.subr.mxu0 0.0
  %80 = vmatpush1.msra.mxu0 0.0
  %81 = vmatprep.subr.mxu0 0.0
  %82 = vmatpush1.msra.mxu0 0.0
  %83 = vmatprep.subr.mxu0 0.0
  %84 = vmatpush1.msra.mxu0 0.0
  %85 = vmatprep.subr.mxu0 0.0
  %86 = vmatpush1.msra.mxu0 0.0
  %87 = vmatprep.subr.mxu0 0.0
  %88 = vmatpush1.msra.mxu0 0.0
  %89 = vmatprep.subr.mxu0 0.0
  %90 = vmatpush1.msra.mxu0 0.0
  %91 = vmatprep.subr.mxu0 0.0
  %92 = vmatpush1.msra.mxu0 0.0
  %93 = vmatprep.subr.mxu0 0.0
  %94 = vmatpush1.msra.mxu0 0.0
  %95 = vmatprep.subr.mxu0 0.0
  %96 = vmatpush1.msra.mxu0 0.0
  %97 = vmatprep.subr.mxu0 0.0
  %98 = vmatpush1.msra.mxu0 0.0
  %99 = vmatprep.mubr.f32.mxu0 0.0
  %100 = vmatmul.mubr.f32.gmra.mrb[0].mxu0 %v17
  %v101 = vpop.f32.mrb[0].mxu0
  %v102 = vadd.f32 0.0, %v101
  %v103 = vpop.f32.mrb[0].mxu0
  %104 = vmatprep.mubr.f32.mxu0 0.0
  %105 = vmatmul.mubr.f32.gmra.mrb[0].mxu0 %v18
  %v106 = vpop.f32.mrb[0].mxu0
  %v107 = vadd.f32 0.0, %v106
  %v108 = vpop.f32.mrb[0].mxu0
  %109 = vdwg.mxu0
  %v110 = vld [vmem:[%s2] sm:$0xff]
  %v111 = vld [vmem:[%s2 + $0x8] sm:$0xff]
  %v112 = vld [vmem:[%s2 + $0x10] sm:$0xff]
  %v113 = vld [vmem:[%s2 + $0x18] sm:$0xff]
  %v114 = vld [vmem:[%s2 + $0x20] sm:$0xff]
  %v115 = vld [vmem:[%s2 + $0x28] sm:$0xff]
  %v116 = vld [vmem:[%s2 + $0x30] sm:$0xff]
  %v117 = vld [vmem:[%s2 + $0x38] sm:$0xff]
  %v118 = vld [vmem:[%s2 + $0x40] sm:$0xff]
  %v119 = vld [vmem:[%s2 + $0x48] sm:$0xff]
  %v120 = vld [vmem:[%s2 + $0x50] sm:$0xff]
  %v121 = vld [vmem:[%s2 + $0x58] sm:$0xff]
  %v122 = vld [vmem:[%s2 + $0x60] sm:$0xff]
  %v123 = vld [vmem:[%s2 + $0x68] sm:$0xff]
  %v124 = vld [vmem:[%s2 + $0x70] sm:$0xff]
  %v125 = vld [vmem:[%s2 + $0x78] sm:$0xff]
  %126 = vmatprep.subr.mxu0 0.0
  %127 = vmatpush1.msra.mxu0 %v110
  %128 = vmatprep.subr.mxu0 0.0
  %129 = vmatpush1.msra.mxu0 %v111
  %130 = vmatprep.subr.mxu0 0.0
  %131 = vmatpush1.msra.mxu0 %v112
  %132 = vmatprep.subr.mxu0 0.0
  %133 = vmatpush1.msra.mxu0 %v113
  %134 = vmatprep.subr.mxu0 0.0
  %135 = vmatpush1.msra.mxu0 %v114
  %136 = vmatprep.subr.mxu0 0.0
  %137 = vmatpush1.msra.mxu0 %v115
  %138 = vmatprep.subr.mxu0 0.0
  %139 = vmatpush1.msra.mxu0 %v116
  %140 = vmatprep.subr.mxu0 0.0
  %141 = vmatpush1.msra.mxu0 %v117
  %142 = vmatprep.subr.mxu0 0.0
  %143 = vmatpush1.msra.mxu0 %v118
  %144 = vmatprep.subr.mxu0 0.0
  %145 = vmatpush1.msra.mxu0 %v119
  %146 = vmatprep.subr.mxu0 0.0
  %147 = vmatpush1.msra.mxu0 %v120
  %148 = vmatprep.subr.mxu0 0.0
  %149 = vmatpush1.msra.mxu0 %v121
  %150 = vmatprep.subr.mxu0 0.0
  %151 = vmatpush1.msra.mxu0 %v122
  %152 = vmatprep.subr.mxu0 0.0
  %153 = vmatpush1.msra.mxu0 %v123
  %154 = vmatprep.subr.mxu0 0.0
  %155 = vmatpush1.msra.mxu0 %v124
  %156 = vmatprep.subr.mxu0 0.0
  %157 = vmatpush1.msra.mxu0 %v125
  %158 = vmatprep.subr.mxu0 0.0
  %159 = vmatpush1.msra.mxu0 0.0
  %160 = vmatprep.subr.mxu0 0.0
  %161 = vmatpush1.msra.mxu0 0.0
  %162 = vmatprep.subr.mxu0 0.0
  %163 = vmatpush1.msra.mxu0 0.0
  %164 = vmatprep.subr.mxu0 0.0
  %165 = vmatpush1.msra.mxu0 0.0
  %166 = vmatprep.subr.mxu0 0.0
  %167 = vmatpush1.msra.mxu0 0.0
  %168 = vmatprep.subr.mxu0 0.0
  %169 = vmatpush1.msra.mxu0 0.0
  %170 = vmatprep.subr.mxu0 0.0
  %171 = vmatpush1.msra.mxu0 0.0
  %172 = vmatprep.subr.mxu0 0.0
  %173 = vmatpush1.msra.mxu0 0.0
  %174 = vmatprep.subr.mxu0 0.0
  %175 = vmatpush1.msra.mxu0 0.0
  %176 = vmatprep.subr.mxu0 0.0
  %177 = vmatpush1.msra.mxu0 0.0
  %178 = vmatprep.subr.mxu0 0.0
  %179 = vmatpush1.msra.mxu0 0.0
  %180 = vmatprep.subr.mxu0 0.0
  %181 = vmatpush1.msra.mxu0 0.0
  %182 = vmatprep.subr.mxu0 0.0
  %183 = vmatpush1.msra.mxu0 0.0
  %184 = vmatprep.subr.mxu0 0.0
  %185 = vmatpush1.msra.mxu0 0.0
  %186 = vmatprep.subr.mxu0 0.0
  %187 = vmatpush1.msra.mxu0 0.0
  %188 = vmatprep.subr.mxu0 0.0
  %189 = vmatpush1.msra.mxu0 0.0
  %190 = vmatprep.mubr.f32.mxu0 0.0
  %191 = vmatmul.mubr.f32.gmra.mrb[0].mxu0 %v17
  %v192 = vpop.f32.mrb[0].mxu0
  %v193 = vadd.f32 0.0, %v192
  %v194 = vpop.f32.mrb[0].mxu0
  %195 = vmatprep.mubr.f32.mxu0 0.0
  %196 = vmatmul.mubr.f32.gmra.mrb[0].mxu0 %v18
  %v197 = vpop.f32.mrb[0].mxu0
  %v198 = vadd.f32 0.0, %v197
  %v199 = vpop.f32.mrb[0].mxu0
  %200 = vdwg.mxu0
  %vm201 = vcmask 261120
  %202 = vst.msk [vmem:[%s3] sm:$0xff] %vm201, %v102
  %vm203 = vcmask 259072
  %204 = vst.msk [vmem:[%s3 + $0x8] sm:$0x3f] %vm203, %v107
  %205 = vst [vmem:[%s4] sm:$0xff] %v193
  %206 = vst [vmem:[%s4 + $0x8] sm:$0x3f] %v198
  %s207 = smul.u32 0, 14
  %v208 = vlaneseq
  %v209 = vshrl.u32 %v208, 7
  %v210 = vadd.s32 %v209, 8
  %v211 = vstv %s207
  %v212 = vadd.s32 %v211, %v209
  %v213 = vadd.s32 %v211, %v210
  %vm214 = vcmp.lt.s32.totalorder %v212, 14
  %vm215 = vcmp.lt.s32.totalorder %v213, 14
  %v216 = vsub.f32 %v17, %v193
  %v217 = vsub.f32 %v18, %v198
  %v218 = vsel %vm214, 1, 0
  %v219 = vsel %vm215, 1, 0
  %vm220 = vcmp.eq.s32.totalorder %v218, 1
  %vm221 = vcmp.eq.s32.totalorder %v219, 1
  %v222 = vsel %vm220, %v216, 0.0
  %v223 = vsel %vm221, %v217, 0.0
  %v224 = vmul.f32 %v222, %v222
  %v225 = vmul.f32 %v223, %v223
  %vm226 = vcmask 1045504
  %v227 = vsel %vm226, %v225, 0.0
  %v228 = vadd.f32 %v224, %v227
  %v229 = vrot.slane %v228, 4
  %v230 = vadd.f32 %v228, %v229
  %v231 = vrot.slane %v230, 2
  %v232 = vadd.f32 %v230, %v231
  %v233 = vrot.slane %v232, 1
  %v234 = vadd.f32 %v232, %v233
  %235 = vst [vmem:[%s5] sm:$0x1] %v234
  // Predicated region
  $region14: #{token_group_encoder_forward.1} parent=0 // pred_check
    _
  $region15: #{token_group_encoder_forward.1} parent=0 // pred_check_branch
    %237 = sbr.rel (0) target = $region17
  $region16: #{token_group_encoder_forward.1} parent=0 // pred_region
    _
  $region17: #{token_group_encoder_forward.1} parent=0 // pred_fallthru
    _
  // Predicated region
  $region18: #{token_group_encoder_forward.1} parent=0 // pred_check
    _
  $region19: #{token_group_encoder_forward.1} parent=0 // pred_check_branch
    %239 = sbr.rel (0) target = $region21
  $region20: #{token_group_encoder_forward.1} parent=0 // pred_region
    _
  $region21: #{token_group_encoder_forward.1} parent=0 // pred_fallthru
    _
  // Predicated region
  $region22: #{token_group_encoder_forward.1} parent=0 // pred_check
    _
  $region23: #{token_group_encoder_forward.1} parent=0 // pred_check_branch
    %241 = sbr.rel (0) target = $region25
  $region24: #{token_group_encoder_forward.1} parent=0 // pred_region
    _
  $region25: #{token_group_encoder_forward.1} parent=0 // pred_fallthru
    _
  // Predicated region
  $region26: #{token_group_encoder_forward.1} parent=0 // pred_check
    _
  $region27: #{token_group_encoder_forward.1} parent=0 // pred_check_branch
    %243 = sbr.rel (0) target = $region29
  $region28: #{token_group_encoder_forward.1} parent=0 // pred_region
    _
  $region29: #{token_group_encoder_forward.1} parent=0 // pred_fallthru
    _
  // Predicated region
  $region30: #{token_group_encoder_forward.1} parent=0 // pred_check
    _
  $region31: #{token_group_encoder_forward.1} parent=0 // pred_check_branch
    %245 = sbr.rel (0) target = $region33
  $region32: #{token_group_encoder_forward.1} parent=0 // pred_region
    _
  $region33: #{token_group_encoder_forward.1} parent=0 // pred_fallthru
    _
  // Predicated region
  $region34: #{token_group_encoder_forward.1} parent=0 // pred_check
    _
  $region35: #{token_group_encoder_forward.1} parent=0 // pred_check_branch
    %247 = sbr.rel (0) target = $region37
  $region36: #{token_group_encoder_forward.1} parent=0 // pred_region
    _
  $region37: #{token_group_encoder_forward.1} parent=0 // pred_fallthru
    _

</llo_original>
